<compile_context>
chip_gen: v7x
topology: tpu7x:2x2x1
jax: 0.10.0
libtpu: 0.0.40
codegen_flags: <defaults>
</compile_context>

<pallas_src>
import jax
import jax.numpy as jnp
from jax.experimental import pallas as pl
from jax.experimental.pallas import tpu as pltpu


# ---------------------------------------------------------------------------
# Kernels
# ---------------------------------------------------------------------------
def _conv1x1_whole_batch_kernel(x_ref, w_ref, b_ref, o_ref):
    """Single grid step holding the whole (small) batch.
    x_ref: (N, Cin, L), w_ref: (Cout, Cin), b_ref: (Cout, 1), o_ref: (N, Cout, L).
    N is small on this path, so a static unroll keeps every matmul a plain
    2-D MXU dot (avoids a 2Dx3D dot_general lowering)."""
    w = w_ref[...]
    b = b_ref[...]
    for n in range(x_ref.shape[0]):
        acc = jnp.dot(w, x_ref[n], preferred_element_type=jnp.float32)
        o_ref[n] = (acc + b).astype(o_ref.dtype)


def _conv1x1_tile_kernel(x_ref, w_ref, b_ref, o_ref):
    """One (batch, spatial-tile) grid step: x_ref (Cin, TM) -> o_ref (Cout, TM)."""
    acc = jnp.dot(w_ref[...], x_ref[...], preferred_element_type=jnp.float32)
    o_ref[...] = (acc + b_ref[...]).astype(o_ref.dtype)


# ---------------------------------------------------------------------------
# Wrapper
# ---------------------------------------------------------------------------
def conv1x1(x_nchw, weight, bias, *, compute_dtype=None):
    """1x1 conv, stride 1.  x_nchw: (N, Cin, H, W); weight: (Cout, Cin, 1, 1);
    bias: (Cout,).  Returns (N, Cout, H, W) in x_nchw.dtype.

    compute_dtype: optional streaming dtype (e.g. jnp.bfloat16) to halve HBM
    bytes on v6e/v7x; default None keeps f32 for bit-exactness vs PyTorch.
    Accumulation is always f32 via preferred_element_type."""
    N, Cin, H, W = x_nchw.shape
    Cout = weight.shape[0]
    HW = H * W
    out_dtype = x_nchw.dtype

    # Lane-dense spatial axis: pad once in HBM to a multiple of 128.
    L = max(128, ((HW + 127) // 128) * 128)

    x3 = x_nchw.reshape(N, Cin, HW)          # view in NCHW layout
    if L != HW:
        x3 = jnp.pad(x3, ((0, 0), (0, 0), (0, L - HW)))
    w_mat = weight.reshape(Cout, Cin)        # (Cout, Cin)
    b_col = bias.reshape(Cout, 1)            # (Cout, 1)

    if compute_dtype is not None:
        x3 = x3.astype(compute_dtype)
        w_mat = w_mat.astype(compute_dtype)

    itemsize = jnp.dtype(x3.dtype).itemsize
    out_itemsize = jnp.dtype(out_dtype).itemsize
    cost = pl.CostEstimate(
        flops=2 * N * L * Cin * Cout,
        transcendentals=0,
        bytes_accessed=int(itemsize * (N * Cin * L + Cout * Cin)
                           + 4 * Cout
                           + out_itemsize * N * Cout * L),
    )

    # ---- Small problems: one grid step, zero degenerate grid axes. ----------
    small_bytes = itemsize * N * (Cin + Cout) * L
    if small_bytes <= (2 << 20):
        out3 = pl.pallas_call(
            _conv1x1_whole_batch_kernel,
            out_shape=jax.ShapeDtypeStruct((N, Cout, L), out_dtype),
            grid=(1,),
            in_specs=[
                pl.BlockSpec((N, Cin, L), lambda i: (0, 0, 0)),
                pl.BlockSpec((Cout, Cin), lambda i: (0, 0)),
                pl.BlockSpec((Cout, 1), lambda i: (0, 0)),
            ],
            out_specs=pl.BlockSpec((N, Cout, L), lambda i: (0, 0, 0)),
            compiler_params=pltpu.CompilerParams(
                dimension_semantics=("arbitrary",)),
            cost_estimate=cost,
        )(x3, w_mat, b_col)
    # ---- Large problems: fixed lane-dense tile, cdiv grid, flat parallel axis.
    else:
        TM = min(L, 1024)                    # multiple of 128 by construction
        M = pl.cdiv(L, TM)                   # partial last block is masked

        out3 = pl.pallas_call(
            _conv1x1_tile_kernel,
            out_shape=jax.ShapeDtypeStruct((N, Cout, L), out_dtype),
            grid=(N * M,),
            in_specs=[
                # streamed input: batch dim squeezed, deeper buffering.
                pl.BlockSpec((None, Cin, TM), lambda i: (i // M, 0, i % M),
                             pipeline_mode=pl.Buffered(3)),
                # grid-invariant operands: stay resident, single buffer.
                pl.BlockSpec((Cout, Cin), lambda i: (0, 0),
                             pipeline_mode=pl.Buffered(1)),
                pl.BlockSpec((Cout, 1), lambda i: (0, 0),
                             pipeline_mode=pl.Buffered(1)),
            ],
            out_specs=pl.BlockSpec((None, Cout, TM),
                                   lambda i: (i // M, 0, i % M),
                                   pipeline_mode=pl.Buffered(3)),
            compiler_params=pltpu.CompilerParams(
                dimension_semantics=("parallel",)),
            cost_estimate=cost,
        )(x3, w_mat, b_col)

    if L != HW:
        out3 = out3[:, :, :HW]
    return out3.reshape(N, Cout, H, W)


# ---------------------------------------------------------------------------
# Self-test
# ---------------------------------------------------------------------------
if __name__ == "__main__":
    key = jax.random.PRNGKey(0)
    k_x, k_w, k_b = jax.random.split(key, 3)

    # Shapes implied by the PyTorch module: Conv2d(64, 64, 1) on (2, 64, 10, 10)
    N, C, H, W = 2, 64, 10, 10
    Cout = 64
    x = jax.random.normal(k_x, (N, C, H, W), dtype=jnp.float32)

    # Deterministic parameter init (Conv2d weight (Cout, Cin, 1, 1) + bias)
    fan_in = C * 1 * 1
    bound = 1.0 / (fan_in ** 0.5)
    weight = jax.random.uniform(k_w, (Cout, C, 1, 1), dtype=jnp.float32,
                                minval=-bound, maxval=bound)
    bias = jax.random.uniform(k_b, (Cout,), dtype=jnp.float32,
                              minval=-bound, maxval=bound)

    out = conv1x1(x, weight, bias)
    jax.block_until_ready(out)

    # Reference in plain JAX (same math): per-pixel matmul + bias.
    ref = jnp.einsum("nchw,oc->nohw", x, weight.reshape(Cout, C)) \
          + bias.reshape(1, Cout, 1, 1)
    assert out.shape == (N, Cout, H, W)
    assert jnp.allclose(out, ref, atol=1e-4, rtol=1e-4)

    print("KERNEL_OK")
</pallas_src>

<mosaic_0001>
module attributes {stable_mosaic.version = 11 : i64} {
  func.func @_conv1x1_whole_batch_kernel(%arg0: i32, %arg1: memref<2x64x128xf32, #tpu.memory_space<vmem>>, %arg2: memref<64x64xf32, #tpu.memory_space<vmem>>, %arg3: memref<64x1xf32, #tpu.memory_space<vmem>>, %arg4: memref<2x64x128xf32, #tpu.memory_space<vmem>>) attributes {dimension_semantics = [#tpu.dimension_semantics<arbitrary>], iteration_bounds = array<i64: 1>, scalar_prefetch = 0 : i64, scratch_operands = 0 : i64, tpu.core_type = #tpu.core_type<tc>, window_params = [{pipeline_mode = #tpu.pipeline_mode<synchronous>, transform_indices = @transform_0, window_bounds = array<i64: 2, 64, 128>}, {pipeline_mode = #tpu.pipeline_mode<synchronous>, transform_indices = @transform_1, window_bounds = array<i64: 64, 64>}, {pipeline_mode = #tpu.pipeline_mode<synchronous>, transform_indices = @transform_2, window_bounds = array<i64: 64, 1>}, {pipeline_mode = #tpu.pipeline_mode<synchronous>, transform_indices = @transform_3, window_bounds = array<i64: 2, 64, 128>}]} {
    %c0 = arith.constant 0 : index
    %c0_0 = arith.constant 0 : index
    %0 = vector.load %arg2[%c0, %c0_0] : memref<64x64xf32, #tpu.memory_space<vmem>>, vector<64x64xf32>
    %c0_1 = arith.constant 0 : index
    %c0_2 = arith.constant 0 : index
    %1 = vector.load %arg3[%c0_1, %c0_2] : memref<64x1xf32, #tpu.memory_space<vmem>>, vector<64x1xf32>
    %c0_3 = arith.constant 0 : index
    %c0_4 = arith.constant 0 : index
    %c0_5 = arith.constant 0 : index
    %2 = vector.load %arg1[%c0_3, %c0_4, %c0_5] : memref<2x64x128xf32, #tpu.memory_space<vmem>>, vector<1x64x128xf32>
    %3 = vector.shape_cast %2 : vector<1x64x128xf32> to vector<64x128xf32>
    %cst = arith.constant dense<0.000000e+00> : vector<64x128xf32>
    %4 = tpu.matmul %0, %3, %cst {dimension_numbers = #tpu.dot_dimension_numbers<[1], [0], [0], [1], [0, 0, 1, 1], [], []>} : vector<64x64xf32>, vector<64x128xf32>, vector<64x128xf32> -> vector<64x128xf32>
    %5 = vector.broadcast %1 : vector<64x1xf32> to vector<64x128xf32>
    %6 = arith.addf %4, %5 : vector<64x128xf32>
    %c0_6 = arith.constant 0 : index
    %c0_7 = arith.constant 0 : index
    %c0_8 = arith.constant 0 : index
    %7 = vector.load %arg4[%c0_6, %c0_7, %c0_8] : memref<2x64x128xf32, #tpu.memory_space<vmem>>, vector<1x64x128xf32>
    %8 = vector.shape_cast %7 : vector<1x64x128xf32> to vector<64x128xf32>
    %9 = vector.shape_cast %6 : vector<64x128xf32> to vector<1x64x128xf32>
    tpu.vector_store %arg4[%c0_6, %c0_7, %c0_8], %9 {strides = array<i32>} : memref<2x64x128xf32, #tpu.memory_space<vmem>>, vector<1x64x128xf32>,
    %c1 = arith.constant 1 : index
    %c0_9 = arith.constant 0 : index
    %c0_10 = arith.constant 0 : index
    %10 = vector.load %arg1[%c1, %c0_9, %c0_10] : memref<2x64x128xf32, #tpu.memory_space<vmem>>, vector<1x64x128xf32>
    %11 = vector.shape_cast %10 : vector<1x64x128xf32> to vector<64x128xf32>
    %cst_11 = arith.constant dense<0.000000e+00> : vector<64x128xf32>
    %12 = tpu.matmul %0, %11, %cst_11 {dimension_numbers = #tpu.dot_dimension_numbers<[1], [0], [0], [1], [0, 0, 1, 1], [], []>} : vector<64x64xf32>, vector<64x128xf32>, vector<64x128xf32> -> vector<64x128xf32>
    %13 = vector.broadcast %1 : vector<64x1xf32> to vector<64x128xf32>
    %14 = arith.addf %12, %13 : vector<64x128xf32>
    %c1_12 = arith.constant 1 : index
    %c0_13 = arith.constant 0 : index
    %c0_14 = arith.constant 0 : index
    %15 = vector.load %arg4[%c1_12, %c0_13, %c0_14] : memref<2x64x128xf32, #tpu.memory_space<vmem>>, vector<1x64x128xf32>
    %16 = vector.shape_cast %15 : vector<1x64x128xf32> to vector<64x128xf32>
    %17 = vector.shape_cast %14 : vector<64x128xf32> to vector<1x64x128xf32>
    tpu.vector_store %arg4[%c1_12, %c0_13, %c0_14], %17 {strides = array<i32>} : memref<2x64x128xf32, #tpu.memory_space<vmem>>, vector<1x64x128xf32>,
    return
  }
  func.func @transform_0(%arg0: i32) -> (i32, i32, i32) {
    %c0_i32 = arith.constant 0 : i32
    %c0_i32_0 = arith.constant 0 : i32
    %c0_i32_1 = arith.constant 0 : i32
    %c0_i32_2 = arith.constant 0 : i32
    return %c0_i32, %c0_i32_0, %c0_i32_1 : i32, i32, i32
  }
  func.func @transform_1(%arg0: i32) -> (i32, i32) {
    %c0_i32 = arith.constant 0 : i32
    %c0_i32_0 = arith.constant 0 : i32
    %c0_i32_1 = arith.constant 0 : i32
    return %c0_i32, %c0_i32_0 : i32, i32
  }
  func.func @transform_2(%arg0: i32) -> (i32, i32) {
    %c0_i32 = arith.constant 0 : i32
    %c0_i32_0 = arith.constant 0 : i32
    %c0_i32_1 = arith.constant 0 : i32
    return %c0_i32, %c0_i32_0 : i32, i32
  }
  func.func @transform_3(%arg0: i32) -> (i32, i32, i32) {
    %c0_i32 = arith.constant 0 : i32
    %c0_i32_0 = arith.constant 0 : i32
    %c0_i32_1 = arith.constant 0 : i32
    %c0_i32_2 = arith.constant 0 : i32
    return %c0_i32, %c0_i32_0, %c0_i32_1 : i32, i32, i32
  }
}

</mosaic_0001>

<llo_original>
// kernel: tpu_custom_call.1
$region0: #{tpu_custom_call.1}
  #allocation0 [shape = 'u32[]', space=smem, size = 0x4, offset = 0x4, fixed_abs, tag = 'smem constant byte address 0x4 - core index']
  #allocation1 [shape = 'u32[144,128]{1,0:T(1,128)}', space=vmem, size = 0x12000, scoped, tag = 'internal scratch']
  %s0 = inlined_call_operand.hbm [shape: f32[2,64,128], index: 0, kind: input, shape index: {}]
  %s1 = inlined_call_operand.vmem [shape: f32[64,64], index: 1, kind: input, shape index: {}]
  %s2 = inlined_call_operand.vmem [shape: f32[64,1], index: 2, kind: input, shape index: {}]
  %s3 = inlined_call_operand.hbm [shape: f32[2,64,128], index: 3, kind: output, shape index: {}]
  %s4 = sld [smem:[#allocation0]]
  $region26: #{tpu_custom_call.1} parent=0
    _
  %s6 = ssub.s32 1, %s4
  %s7 = scalar_select 0, %s6, %s4
  $region1: #{tpu_custom_call.1} parent=0
    #allocation2 [shape = 'u8[65536]{0}', space=vmem, size = 0x10000, scoped, tag = 'input window, operand 0, single buffered']
    #allocation3 [shape = 's32[1]{0}', space=sflag, size = 0x4, scoped, tag = 'scoped memory for tpu_custom_call.1']
    #allocation4 [shape = 's32[1]{0}', space=sflag, size = 0x4, scoped, tag = 'scoped memory for tpu_custom_call.1']
    #allocation5 [shape = 'u8[65536]{0}', space=vmem, size = 0x10000, scoped, tag = 'output window, operand 0, single buffered']
    %8 = vsyncpa [#allocation3], 0
    %9 = vsyncpa [#allocation4], 0
    // Predicated region
    $region2: #{tpu_custom_call.1} parent=1 // pred_check
      _
    $region3: #{tpu_custom_call.1} parent=1 // pred_check_branch
      %11 = sbr.rel (0) target = $region5
    $region4: #{tpu_custom_call.1} parent=1 // pred_region
      %s13 = ssub.s32 2048, 2048
      %14 = vsyncadd [#allocation3], %s13
      %s15 = sshll.u32 [#allocation2], 4
      %s16 = int_to_ptr.vmem [resolvable:$true] %s15
      %21 = dma.hbm_to_vmem [thread:$0]  %s0, 2048, %s16, [#allocation3], 128, 128, 8
    $region5: #{tpu_custom_call.1} parent=1 // pred_fallthru
      _
    // Predicated region
    $region6: #{tpu_custom_call.1} parent=1 // pred_check
      _
    $region7: #{tpu_custom_call.1} parent=1 // pred_check_branch
      %23 = sbr.rel (0) target = $region9
    $region8: #{tpu_custom_call.1} parent=1 // pred_region
      _
    $region9: #{tpu_custom_call.1} parent=1 // pred_fallthru
      _
    // Predicated region
    $region10: #{tpu_custom_call.1} parent=1 // pred_check
      _
    $region11: #{tpu_custom_call.1} parent=1 // pred_check_branch
      %25 = sbr.rel (0) target = $region13
    $region12: #{tpu_custom_call.1} parent=1 // pred_region
      _
    $region13: #{tpu_custom_call.1} parent=1 // pred_fallthru
      _
    // Predicated region
    $region14: #{tpu_custom_call.1} parent=1 // pred_check
      _
    $region15: #{tpu_custom_call.1} parent=1 // pred_check_branch
      %27 = sbr.rel (0) target = $region17
    $region16: #{tpu_custom_call.1} parent=1 // pred_region
      %28 = dma.done [#allocation3], 2048
    $region17: #{tpu_custom_call.1} parent=1 // pred_fallthru
      _
    %v29 = vld [vmem:[%s1] sm:$0xff]
    %v30 = vld [vmem:[%s1 + $0x8] sm:$0xff]
    %v31 = vld [vmem:[%s1 + $0x10] sm:$0xff]
    %v32 = vld [vmem:[%s1 + $0x18] sm:$0xff]
    %v33 = vld [vmem:[%s1 + $0x20] sm:$0xff]
    %v34 = vld [vmem:[%s1 + $0x28] sm:$0xff]
    %v35 = vld [vmem:[%s1 + $0x30] sm:$0xff]
    %v36 = vld [vmem:[%s1 + $0x38] sm:$0xff]
    %v37 = vld [vmem:[%s2] sm:$0xff]
    %v38 = vld [vmem:[%s2 + $0x8] sm:$0xff]
    %v39 = vld [vmem:[%s2 + $0x10] sm:$0xff]
    %v40 = vld [vmem:[%s2 + $0x18] sm:$0xff]
    %v41 = vld [vmem:[%s2 + $0x20] sm:$0xff]
    %v42 = vld [vmem:[%s2 + $0x28] sm:$0xff]
    %v43 = vld [vmem:[%s2 + $0x30] sm:$0xff]
    %v44 = vld [vmem:[%s2 + $0x38] sm:$0xff]
    %v45 = vld [vmem:[#allocation2] sm:$0xff]
    %v46 = vld [vmem:[#allocation2 + $0x8] sm:$0xff]
    %v47 = vld [vmem:[#allocation2 + $0x10] sm:$0xff]
    %v48 = vld [vmem:[#allocation2 + $0x18] sm:$0xff]
    %v49 = vld [vmem:[#allocation2 + $0x20] sm:$0xff]
    %v50 = vld [vmem:[#allocation2 + $0x28] sm:$0xff]
    %v51 = vld [vmem:[#allocation2 + $0x30] sm:$0xff]
    %v52 = vld [vmem:[#allocation2 + $0x38] sm:$0xff]
    %54 = vset.pattern.permute.xlu0 0
    %55 = vperm.xlu0 %54, %v37
    %v56 = vpop.permute.xlu0 %55
    %59 = vset.pattern.permute.xlu0 0
    %60 = vperm.xlu0 %59, %v38
    %v61 = vpop.permute.xlu0 %60
    %64 = vset.pattern.permute.xlu0 0
    %65 = vperm.xlu0 %64, %v39
    %v66 = vpop.permute.xlu0 %65
    %69 = vset.pattern.permute.xlu0 0
    %70 = vperm.xlu0 %69, %v40
    %v71 = vpop.permute.xlu0 %70
    %74 = vset.pattern.permute.xlu0 0
    %75 = vperm.xlu0 %74, %v41
    %v76 = vpop.permute.xlu0 %75
    %79 = vset.pattern.permute.xlu0 0
    %80 = vperm.xlu0 %79, %v42
    %v81 = vpop.permute.xlu0 %80
    %84 = vset.pattern.permute.xlu0 0
    %85 = vperm.xlu0 %84, %v43
    %v86 = vpop.permute.xlu0 %85
    %89 = vset.pattern.permute.xlu0 0
    %90 = vperm.xlu0 %89, %v44
    %v91 = vpop.permute.xlu0 %90
    %vm93 = vcmask 523264
    %v95 = vsel %vm93, %v29, 0
    %v98 = vsel %vm93, %v30, 0
    %v101 = vsel %vm93, %v31, 0
    %v104 = vsel %vm93, %v32, 0
    %v107 = vsel %vm93, %v33, 0
    %v110 = vsel %vm93, %v34, 0
    %v113 = vsel %vm93, %v35, 0
    %v116 = vsel %vm93, %v36, 0
    %118 = vmatprep.subr.mxu0 0.0
    %119 = vmatpush1.msra.mxu0 %v45
    %120 = vmatprep.subr.mxu0 0.0
    %121 = vmatpush1.msra.mxu0 %v46
    %122 = vmatprep.subr.mxu0 0.0
    %123 = vmatpush1.msra.mxu0 %v47
    %124 = vmatprep.subr.mxu0 0.0
    %125 = vmatpush1.msra.mxu0 %v48
    %126 = vmatprep.subr.mxu0 0.0
    %127 = vmatpush1.msra.mxu0 %v49
    %128 = vmatprep.subr.mxu0 0.0
    %129 = vmatpush1.msra.mxu0 %v50
    %130 = vmatprep.subr.mxu0 0.0
    %131 = vmatpush1.msra.mxu0 %v51
    %132 = vmatprep.subr.mxu0 0.0
    %133 = vmatpush1.msra.mxu0 %v52
    %134 = vmatprep.subr.mxu0 0.0
    %135 = vmatpush1.msra.mxu0 0.0
    %136 = vmatprep.subr.mxu0 0.0
    %137 = vmatpush1.msra.mxu0 0.0
    %138 = vmatprep.subr.mxu0 0.0
    %139 = vmatpush1.msra.mxu0 0.0
    %140 = vmatprep.subr.mxu0 0.0
    %141 = vmatpush1.msra.mxu0 0.0
    %142 = vmatprep.subr.mxu0 0.0
    %143 = vmatpush1.msra.mxu0 0.0
    %144 = vmatprep.subr.mxu0 0.0
    %145 = vmatpush1.msra.mxu0 0.0
    %146 = vmatprep.subr.mxu0 0.0
    %147 = vmatpush1.msra.mxu0 0.0
    %148 = vmatprep.subr.mxu0 0.0
    %149 = vmatpush1.msra.mxu0 0.0
    %150 = vmatprep.subr.mxu0 0.0
    %151 = vmatpush1.msra.mxu0 0.0
    %152 = vmatprep.subr.mxu0 0.0
    %153 = vmatpush1.msra.mxu0 0.0
    %154 = vmatprep.subr.mxu0 0.0
    %155 = vmatpush1.msra.mxu0 0.0
    %156 = vmatprep.subr.mxu0 0.0
    %157 = vmatpush1.msra.mxu0 0.0
    %158 = vmatprep.subr.mxu0 0.0
    %159 = vmatpush1.msra.mxu0 0.0
    %160 = vmatprep.subr.mxu0 0.0
    %161 = vmatpush1.msra.mxu0 0.0
    %162 = vmatprep.subr.mxu0 0.0
    %163 = vmatpush1.msra.mxu0 0.0
    %164 = vmatprep.subr.mxu0 0.0
    %165 = vmatpush1.msra.mxu0 0.0
    %166 = vmatprep.subr.mxu0 0.0
    %167 = vmatpush1.msra.mxu0 0.0
    %168 = vmatprep.subr.mxu0 0.0
    %169 = vmatpush1.msra.mxu0 0.0
    %170 = vmatprep.subr.mxu0 0.0
    %171 = vmatpush1.msra.mxu0 0.0
    %172 = vmatprep.subr.mxu0 0.0
    %173 = vmatpush1.msra.mxu0 0.0
    %174 = vmatprep.subr.mxu0 0.0
    %175 = vmatpush1.msra.mxu0 0.0
    %176 = vmatprep.subr.mxu0 0.0
    %177 = vmatpush1.msra.mxu0 0.0
    %178 = vmatprep.subr.mxu0 0.0
    %179 = vmatpush1.msra.mxu0 0.0
    %180 = vmatprep.subr.mxu0 0.0
    %181 = vmatpush1.msra.mxu0 0.0
    %182 = vmatprep.mubr.f32.mxu0 0.0
    %183 = vmatmul.mubr.f32.gmra.mrb[0].mxu0 %v95
    %v184 = vpop.f32.mrb[0].mxu0
    %v185 = vadd.f32 %v56, %v184
    %v186 = vpop.f32.mrb[0].mxu0
    %187 = vmatprep.mubr.f32.mxu0 0.0
    %188 = vmatmul.mubr.f32.gmra.mrb[0].mxu0 %v98
    %v189 = vpop.f32.mrb[0].mxu0
    %v190 = vadd.f32 %v61, %v189
    %v191 = vpop.f32.mrb[0].mxu0
    %192 = vmatprep.mubr.f32.mxu0 0.0
    %193 = vmatmul.mubr.f32.gmra.mrb[0].mxu0 %v101
    %v194 = vpop.f32.mrb[0].mxu0
    %v195 = vadd.f32 %v66, %v194
    %v196 = vpop.f32.mrb[0].mxu0
    %197 = vmatprep.mubr.f32.mxu0 0.0
    %198 = vmatmul.mubr.f32.gmra.mrb[0].mxu0 %v104
    %v199 = vpop.f32.mrb[0].mxu0
    %v200 = vadd.f32 %v71, %v199
    %v201 = vpop.f32.mrb[0].mxu0
    %202 = vmatprep.mubr.f32.mxu0 0.0
    %203 = vmatmul.mubr.f32.gmra.mrb[0].mxu0 %v107
    %v204 = vpop.f32.mrb[0].mxu0
    %v205 = vadd.f32 %v76, %v204
    %v206 = vpop.f32.mrb[0].mxu0
    %207 = vmatprep.mubr.f32.mxu0 0.0
    %208 = vmatmul.mubr.f32.gmra.mrb[0].mxu0 %v110
    %v209 = vpop.f32.mrb[0].mxu0
    %v210 = vadd.f32 %v81, %v209
    %v211 = vpop.f32.mrb[0].mxu0
    %212 = vmatprep.mubr.f32.mxu0 0.0
    %213 = vmatmul.mubr.f32.gmra.mrb[0].mxu0 %v113
    %v214 = vpop.f32.mrb[0].mxu0
    %v215 = vadd.f32 %v86, %v214
    %v216 = vpop.f32.mrb[0].mxu0
    %217 = vmatprep.mubr.f32.mxu0 0.0
    %218 = vmatmul.mubr.f32.gmra.mrb[0].mxu0 %v116
    %v219 = vpop.f32.mrb[0].mxu0
    %v220 = vadd.f32 %v91, %v219
    %v221 = vpop.f32.mrb[0].mxu0
    %222 = vdwg.mxu0
    %223 = vst [vmem:[#allocation5] sm:$0xff] %v185
    %224 = vst [vmem:[#allocation5 + $0x8] sm:$0xff] %v190
    %225 = vst [vmem:[#allocation5 + $0x10] sm:$0xff] %v195
    %226 = vst [vmem:[#allocation5 + $0x18] sm:$0xff] %v200
    %227 = vst [vmem:[#allocation5 + $0x20] sm:$0xff] %v205
    %228 = vst [vmem:[#allocation5 + $0x28] sm:$0xff] %v210
    %229 = vst [vmem:[#allocation5 + $0x30] sm:$0xff] %v215
    %230 = vst [vmem:[#allocation5 + $0x38] sm:$0xff] %v220
    %s231 = scalar_lea.vmem [#allocation2], 64
    %v232 = vld [vmem:[%s231] sm:$0xff]
    %v233 = vld [vmem:[%s231 + $0x8] sm:$0xff]
    %v234 = vld [vmem:[%s231 + $0x10] sm:$0xff]
    %v235 = vld [vmem:[%s231 + $0x18] sm:$0xff]
    %v236 = vld [vmem:[%s231 + $0x20] sm:$0xff]
    %v237 = vld [vmem:[%s231 + $0x28] sm:$0xff]
    %v238 = vld [vmem:[%s231 + $0x30] sm:$0xff]
    %v239 = vld [vmem:[%s231 + $0x38] sm:$0xff]
    %240 = vmatprep.subr.mxu0 0.0
    %241 = vmatpush1.msra.mxu0 %v232
    %242 = vmatprep.subr.mxu0 0.0
    %243 = vmatpush1.msra.mxu0 %v233
    %244 = vmatprep.subr.mxu0 0.0
    %245 = vmatpush1.msra.mxu0 %v234
    %246 = vmatprep.subr.mxu0 0.0
    %247 = vmatpush1.msra.mxu0 %v235
    %248 = vmatprep.subr.mxu0 0.0
    %249 = vmatpush1.msra.mxu0 %v236
    %250 = vmatprep.subr.mxu0 0.0
    %251 = vmatpush1.msra.mxu0 %v237
    %252 = vmatprep.subr.mxu0 0.0
    %253 = vmatpush1.msra.mxu0 %v238
    %254 = vmatprep.subr.mxu0 0.0
    %255 = vmatpush1.msra.mxu0 %v239
    %256 = vmatprep.subr.mxu0 0.0
    %257 = vmatpush1.msra.mxu0 0.0
    %258 = vmatprep.subr.mxu0 0.0
    %259 = vmatpush1.msra.mxu0 0.0
    %260 = vmatprep.subr.mxu0 0.0
    %261 = vmatpush1.msra.mxu0 0.0
    %262 = vmatprep.subr.mxu0 0.0
    %263 = vmatpush1.msra.mxu0 0.0
    %264 = vmatprep.subr.mxu0 0.0
    %265 = vmatpush1.msra.mxu0 0.0
    %266 = vmatprep.subr.mxu0 0.0
    %267 = vmatpush1.msra.mxu0 0.0
    %268 = vmatprep.subr.mxu0 0.0
    %269 = vmatpush1.msra.mxu0 0.0
    %270 = vmatprep.subr.mxu0 0.0
    %271 = vmatpush1.msra.mxu0 0.0
    %272 = vmatprep.subr.mxu0 0.0
    %273 = vmatpush1.msra.mxu0 0.0
    %274 = vmatprep.subr.mxu0 0.0
    %275 = vmatpush1.msra.mxu0 0.0
    %276 = vmatprep.subr.mxu0 0.0
    %277 = vmatpush1.msra.mxu0 0.0
    %278 = vmatprep.subr.mxu0 0.0
    %279 = vmatpush1.msra.mxu0 0.0
    %280 = vmatprep.subr.mxu0 0.0
    %281 = vmatpush1.msra.mxu0 0.0
    %282 = vmatprep.subr.mxu0 0.0
    %283 = vmatpush1.msra.mxu0 0.0
    %284 = vmatprep.subr.mxu0 0.0
    %285 = vmatpush1.msra.mxu0 0.0
    %286 = vmatprep.subr.mxu0 0.0
    %287 = vmatpush1.msra.mxu0 0.0
    %288 = vmatprep.subr.mxu0 0.0
    %289 = vmatpush1.msra.mxu0 0.0
    %290 = vmatprep.subr.mxu0 0.0
    %291 = vmatpush1.msra.mxu0 0.0
    %292 = vmatprep.subr.mxu0 0.0
    %293 = vmatpush1.msra.mxu0 0.0
    %294 = vmatprep.subr.mxu0 0.0
    %295 = vmatpush1.msra.mxu0 0.0
    %296 = vmatprep.subr.mxu0 0.0
    %297 = vmatpush1.msra.mxu0 0.0
    %298 = vmatprep.subr.mxu0 0.0
    %299 = vmatpush1.msra.mxu0 0.0
    %300 = vmatprep.subr.mxu0 0.0
    %301 = vmatpush1.msra.mxu0 0.0
    %302 = vmatprep.subr.mxu0 0.0
    %303 = vmatpush1.msra.mxu0 0.0
    %304 = vmatprep.mubr.f32.mxu0 0.0
    %305 = vmatmul.mubr.f32.gmra.mrb[0].mxu0 %v95
    %v306 = vpop.f32.mrb[0].mxu0
    %v307 = vadd.f32 %v56, %v306
    %v308 = vpop.f32.mrb[0].mxu0
    %309 = vmatprep.mubr.f32.mxu0 0.0
    %310 = vmatmul.mubr.f32.gmra.mrb[0].mxu0 %v98
    %v311 = vpop.f32.mrb[0].mxu0
    %v312 = vadd.f32 %v61, %v311
    %v313 = vpop.f32.mrb[0].mxu0
    %314 = vmatprep.mubr.f32.mxu0 0.0
    %315 = vmatmul.mubr.f32.gmra.mrb[0].mxu0 %v101
    %v316 = vpop.f32.mrb[0].mxu0
    %v317 = vadd.f32 %v66, %v316
    %v318 = vpop.f32.mrb[0].mxu0
    %319 = vmatprep.mubr.f32.mxu0 0.0
    %320 = vmatmul.mubr.f32.gmra.mrb[0].mxu0 %v104
    %v321 = vpop.f32.mrb[0].mxu0
    %v322 = vadd.f32 %v71, %v321
    %v323 = vpop.f32.mrb[0].mxu0
    %324 = vmatprep.mubr.f32.mxu0 0.0
    %325 = vmatmul.mubr.f32.gmra.mrb[0].mxu0 %v107
    %v326 = vpop.f32.mrb[0].mxu0
    %v327 = vadd.f32 %v76, %v326
    %v328 = vpop.f32.mrb[0].mxu0
    %329 = vmatprep.mubr.f32.mxu0 0.0
    %330 = vmatmul.mubr.f32.gmra.mrb[0].mxu0 %v110
    %v331 = vpop.f32.mrb[0].mxu0
    %v332 = vadd.f32 %v81, %v331
    %v333 = vpop.f32.mrb[0].mxu0
    %334 = vmatprep.mubr.f32.mxu0 0.0
    %335 = vmatmul.mubr.f32.gmra.mrb[0].mxu0 %v113
    %v336 = vpop.f32.mrb[0].mxu0
    %v337 = vadd.f32 %v86, %v336
    %v338 = vpop.f32.mrb[0].mxu0
    %339 = vmatprep.mubr.f32.mxu0 0.0
    %340 = vmatmul.mubr.f32.gmra.mrb[0].mxu0 %v116
    %v341 = vpop.f32.mrb[0].mxu0
    %v342 = vadd.f32 %v91, %v341
    %v343 = vpop.f32.mrb[0].mxu0
    %344 = vdwg.mxu0
    %s345 = scalar_lea.vmem [#allocation5], 64
    %346 = vst [vmem:[%s345] sm:$0xff] %v307
    %347 = vst [vmem:[%s345 + $0x8] sm:$0xff] %v312
    %348 = vst [vmem:[%s345 + $0x10] sm:$0xff] %v317
    %349 = vst [vmem:[%s345 + $0x18] sm:$0xff] %v322
    %350 = vst [vmem:[%s345 + $0x20] sm:$0xff] %v327
    %351 = vst [vmem:[%s345 + $0x28] sm:$0xff] %v332
    %352 = vst [vmem:[%s345 + $0x30] sm:$0xff] %v337
    %353 = vst [vmem:[%s345 + $0x38] sm:$0xff] %v342
    // Predicated region
    $region18: #{tpu_custom_call.1} parent=1 // pred_check
      _
    $region19: #{tpu_custom_call.1} parent=1 // pred_check_branch
      %355 = sbr.rel (0) target = $region21
    $region20: #{tpu_custom_call.1} parent=1 // pred_region
      %s357 = ssub.s32 2048, 2048
      %358 = vsyncadd [#allocation4], %s357
      %s359 = sshll.u32 [#allocation5], 4
      %s360 = int_to_ptr.vmem [resolvable:$true] %s359
      %365 = dma.vmem_to_hbm [thread:$0]  %s360, 2048, %s3, [#allocation4], 128, 128, 8
    $region21: #{tpu_custom_call.1} parent=1 // pred_fallthru
      _
    // Predicated region
    $region22: #{tpu_custom_call.1} parent=1 // pred_check
      _
    $region23: #{tpu_custom_call.1} parent=1 // pred_check_branch
      %367 = sbr.rel (0) target = $region25
    $region24: #{tpu_custom_call.1} parent=1 // pred_region
      %368 = dma.done [#allocation4], 2048
    $region25: #{tpu_custom_call.1} parent=1 // pred_fallthru
      _
    %369 = vsyncpa [#allocation3], 1
    %370 = vsyncpa [#allocation4], 1

</llo_original>
